<compile_context>
chip_gen: v6e
topology: v6e:2x2x1
jax: 0.10.0
libtpu: 0.0.40
codegen_flags: <defaults>
</compile_context>

<pallas_src>
import functools

import jax
import jax.numpy as jnp
from jax.experimental import pallas as pl
from jax.experimental.pallas import tpu as pltpu


def _round_up(n, m):
    return ((n + m - 1) // m) * m


def _default_activation_dtype(is_bf16):
    """bf16 tanh only where the VPU/EUP have a bf16 path (v6e / v7x)."""
    if not is_bf16:
        return jnp.float32
    try:
        kind = jax.devices()[0].device_kind.lower()
    except Exception:
        kind = ""
    if "v6" in kind or "v7" in kind:
        return jnp.bfloat16
    return jnp.float32


def _mlp_kernel(x_ref, w1_ref, b1_ref, w2_ref, b2_ref, o_ref, *, act_dtype):
    # x streams from HBM in its native dtype; cast to the MXU feed dtype in VMEM
    # (avoids a separate wrapper-side HBM pass over x).
    x = x_ref[...].astype(w1_ref.dtype)
    # Layer 1 on the MXU, f32 accumulation.
    h = jnp.dot(x, w1_ref[...], preferred_element_type=jnp.float32)
    h = h + b1_ref[...]                              # f32 bias add
    h = jnp.tanh(h.astype(act_dtype))                # EUP; bf16 on v6e/v7x
    # Layer 2 on the MXU, f32 accumulation; store the real (tb, D_out) block.
    y = jnp.dot(h.astype(w2_ref.dtype), w2_ref[...],
                preferred_element_type=jnp.float32)
    o_ref[...] = (y + b2_ref[...]).astype(o_ref.dtype)


def prepare_params(w1, b1, w2, b2, *, use_bf16=True):
    """One-time parameter prep (hoisted out of the per-call path).

    Weights are stored pre-transposed as (in_features, out_features) so the
    kernel computes x @ W + b directly on the MXU.
    """
    compute_dtype = jnp.bfloat16 if use_bf16 else jnp.asarray(w1).dtype
    w1c = jnp.asarray(w1, compute_dtype)
    w2c = jnp.asarray(w2, compute_dtype)
    b1f = jnp.asarray(b1, jnp.float32).reshape(1, -1)
    b2f = jnp.asarray(b2, jnp.float32).reshape(1, -1)
    return w1c, b1f, w2c, b2f


def mlp_forward(x, params, *, batch_tile=1024, min_pallas_batch=512,
                force_pallas=False, activation_dtype=None,
                vmem_limit_bytes=None):
    """Fused Linear(D_in,H) -> Tanh -> Linear(H,D_out) forward."""
    w1c, b1f, w2c, b2f = params
    B, D_in = x.shape
    H = w1c.shape[1]
    D_out = w2c.shape[1]
    out_dtype = x.dtype

    # Tiny batches: launch / per-grid-step overhead dominates; fused XLA wins.
    if B < min_pallas_batch and not force_pallas:
        h = jnp.tanh((x @ w1c).astype(jnp.float32) + b1f)
        y = (h.astype(w2c.dtype) @ w2c).astype(jnp.float32) + b2f
        return y.astype(out_dtype)

    is_bf16 = w1c.dtype == jnp.bfloat16
    if activation_dtype is None:
        activation_dtype = _default_activation_dtype(is_bf16)

    granule = 16 if is_bf16 else 8   # bf16 packs two rows per sublane
    assert batch_tile % granule == 0, "batch_tile must match sublane packing"

    # Biggest tile that still leaves >= 2 grid steps when the batch can be split
    # (pipelining overlap + v7x dual-TensorCore sharding of the parallel axis).
    tb = batch_tile
    if B > 2 * granule:
        tb = min(tb, _round_up(-(-B // 2), granule))
    tb = min(tb, _round_up(B, granule))
    n_tiles = pl.cdiv(B, tb)

    cost = pl.CostEstimate(
        flops=2 * B * (D_in * H + H * D_out),
        transcendentals=B * H,
        bytes_accessed=(B * D_in * x.dtype.itemsize                 # x stream
                        + (D_in * H + H * D_out) * w1c.dtype.itemsize  # weights
                        + (H + D_out) * 4                           # f32 biases
                        + B * D_out * jnp.dtype(out_dtype).itemsize),
    )

    kernel = functools.partial(_mlp_kernel, act_dtype=activation_dtype)

    return pl.pallas_call(
        kernel,
        out_shape=jax.ShapeDtypeStruct((B, D_out), out_dtype),
        grid_spec=pltpu.PrefetchScalarGridSpec(
            num_scalar_prefetch=0,
            grid=(n_tiles,),
            in_specs=[
                pl.BlockSpec((tb, D_in), lambda i: (i, 0)),   # x: batch-tiled stream
                pl.BlockSpec((D_in, H), lambda i: (0, 0)),    # W1: resident
                pl.BlockSpec((1, H), lambda i: (0, 0)),       # b1 (f32)
                pl.BlockSpec((H, D_out), lambda i: (0, 0)),   # W2: resident
                pl.BlockSpec((1, D_out), lambda i: (0, 0)),   # b2 (f32)
            ],
            out_specs=pl.BlockSpec((tb, D_out), lambda i: (i, 0)),  # unpadded
        ),
        compiler_params=pltpu.CompilerParams(
            dimension_semantics=("parallel",),
            vmem_limit_bytes=vmem_limit_bytes,
        ),
        cost_estimate=cost,
    )(x, w1c, b1f, w2c, b2f)


def init_params(key, d_in, hidden, d_out, dtype=jnp.float32):
    # Deterministic init mimicking PyTorch nn.Linear default:
    # U(-1/sqrt(fan_in), 1/sqrt(fan_in)) for both weight and bias.
    k1, k2, k3, k4 = jax.random.split(key, 4)
    bound1 = 1.0 / jnp.sqrt(d_in)
    bound2 = 1.0 / jnp.sqrt(hidden)
    w1 = jax.random.uniform(k1, (d_in, hidden), dtype, -bound1, bound1)
    b1 = jax.random.uniform(k2, (1, hidden), dtype, -bound1, bound1)
    w2 = jax.random.uniform(k3, (hidden, d_out), dtype, -bound2, bound2)
    b2 = jax.random.uniform(k4, (1, d_out), dtype, -bound2, bound2)
    return w1, b1, w2, b2


if __name__ == "__main__":
    key = jax.random.PRNGKey(0)
    kx, kp = jax.random.split(key)

    d_in, hidden, d_out = 32, 64, 16
    w1, b1, w2, b2 = init_params(kp, d_in, hidden, d_out)

    def ref_fwd(xx):
        return jnp.tanh(xx @ w1 + b1) @ w2 + b2

    # One-time parameter prep (hoisted out of the forward path).
    params_f32 = prepare_params(w1, b1, w2, b2, use_bf16=False)
    params_bf16 = prepare_params(w1, b1, w2, b2, use_bf16=True)

    # 1) Pallas path, f32 compute, batch that forces a ragged last tile
    #    (500 rows -> 2 tiles of 256, second partial; OOB rows never written).
    batch = 500
    x = jax.random.normal(kx, (batch, d_in), jnp.float32)
    out = jax.block_until_ready(
        mlp_forward(x, params_f32, force_pallas=True))
    assert out.shape == (batch, d_out)
    assert jnp.allclose(out, ref_fwd(x), atol=1e-5, rtol=1e-5)

    # 2) Pallas path, bf16 MXU feeds (f32 accumulation; tanh dtype picked per
    #    device generation).
    out_bf = jax.block_until_ready(
        mlp_forward(x, params_bf16, force_pallas=True))
    assert out_bf.shape == (batch, d_out)
    assert jnp.allclose(out_bf, ref_fwd(x), atol=5e-2, rtol=5e-2)

    # 3) Tiny batch dispatches to the plain-JAX fallback (overhead-dominated).
    x_small = jax.random.normal(kx, (8, d_in), jnp.float32)
    out_small = jax.block_until_ready(mlp_forward(x_small, params_f32))
    assert jnp.allclose(out_small, ref_fwd(x_small), atol=1e-5, rtol=1e-5)

    print("KERNEL_OK")
</pallas_src>

<mosaic_0001>
module attributes {stable_mosaic.version = 11 : i64} {
  func.func @_mlp_kernel(%arg0: i32, %arg1: memref<256x32xf32, #tpu.memory_space<vmem>>, %arg2: memref<32x64xf32, #tpu.memory_space<vmem>>, %arg3: memref<1x64xf32, #tpu.memory_space<vmem>>, %arg4: memref<64x16xf32, #tpu.memory_space<vmem>>, %arg5: memref<1x16xf32, #tpu.memory_space<vmem>>, %arg6: memref<256x16xf32, #tpu.memory_space<vmem>>) attributes {dimension_semantics = [#tpu.dimension_semantics<parallel>], iteration_bounds = array<i64: 2>, scalar_prefetch = 0 : i64, scratch_operands = 0 : i64, tpu.core_type = #tpu.core_type<tc>, window_params = [{transform_indices = @transform_0, window_bounds = array<i64: 256, 32>}, {pipeline_mode = #tpu.pipeline_mode<synchronous>, transform_indices = @transform_1, window_bounds = array<i64: 32, 64>}, {pipeline_mode = #tpu.pipeline_mode<synchronous>, transform_indices = @transform_2, window_bounds = array<i64: 1, 64>}, {pipeline_mode = #tpu.pipeline_mode<synchronous>, transform_indices = @transform_3, window_bounds = array<i64: 64, 16>}, {pipeline_mode = #tpu.pipeline_mode<synchronous>, transform_indices = @transform_4, window_bounds = array<i64: 1, 16>}, {transform_indices = @transform_5, window_bounds = array<i64: 256, 16>}]} {
    %c0 = arith.constant 0 : index
    %c0_0 = arith.constant 0 : index
    %0 = vector.load %arg1[%c0, %c0_0] : memref<256x32xf32, #tpu.memory_space<vmem>>, vector<256x32xf32>
    %c0_1 = arith.constant 0 : index
    %c0_2 = arith.constant 0 : index
    %1 = vector.load %arg2[%c0_1, %c0_2] : memref<32x64xf32, #tpu.memory_space<vmem>>, vector<32x64xf32>
    %cst = arith.constant dense<0.000000e+00> : vector<256x64xf32>
    %2 = tpu.matmul %0, %1, %cst {dimension_numbers = #tpu.dot_dimension_numbers<[1], [0], [0], [1], [0, 0, 1, 1], [], []>} : vector<256x32xf32>, vector<32x64xf32>, vector<256x64xf32> -> vector<256x64xf32>
    %c0_3 = arith.constant 0 : index
    %c0_4 = arith.constant 0 : index
    %3 = vector.load %arg3[%c0_3, %c0_4] : memref<1x64xf32, #tpu.memory_space<vmem>>, vector<1x64xf32>
    %4 = vector.broadcast %3 : vector<1x64xf32> to vector<256x64xf32>
    %5 = arith.addf %2, %4 : vector<256x64xf32>
    %6 = math.tanh %5 : vector<256x64xf32>
    %c0_5 = arith.constant 0 : index
    %c0_6 = arith.constant 0 : index
    %7 = vector.load %arg4[%c0_5, %c0_6] : memref<64x16xf32, #tpu.memory_space<vmem>>, vector<64x16xf32>
    %cst_7 = arith.constant dense<0.000000e+00> : vector<256x16xf32>
    %8 = tpu.matmul %6, %7, %cst_7 {dimension_numbers = #tpu.dot_dimension_numbers<[1], [0], [0], [1], [0, 0, 1, 1], [], []>} : vector<256x64xf32>, vector<64x16xf32>, vector<256x16xf32> -> vector<256x16xf32>
    %c0_8 = arith.constant 0 : index
    %c0_9 = arith.constant 0 : index
    %9 = vector.load %arg5[%c0_8, %c0_9] : memref<1x16xf32, #tpu.memory_space<vmem>>, vector<1x16xf32>
    %10 = vector.broadcast %9 : vector<1x16xf32> to vector<256x16xf32>
    %11 = arith.addf %8, %10 : vector<256x16xf32>
    %c0_10 = arith.constant 0 : index
    %c0_11 = arith.constant 0 : index
    %12 = vector.load %arg6[%c0_10, %c0_11] : memref<256x16xf32, #tpu.memory_space<vmem>>, vector<256x16xf32>
    tpu.vector_store %arg6[%c0_10, %c0_11], %11 {strides = array<i32>} : memref<256x16xf32, #tpu.memory_space<vmem>>, vector<256x16xf32>,
    return
  }
  func.func @transform_0(%arg0: i32) -> (i32, i32) {
    %c0_i32 = arith.constant 0 : i32
    %c0_i32_0 = arith.constant 0 : i32
    return %arg0, %c0_i32 : i32, i32
  }
  func.func @transform_1(%arg0: i32) -> (i32, i32) {
    %c0_i32 = arith.constant 0 : i32
    %c0_i32_0 = arith.constant 0 : i32
    %c0_i32_1 = arith.constant 0 : i32
    return %c0_i32, %c0_i32_0 : i32, i32
  }
  func.func @transform_2(%arg0: i32) -> (i32, i32) {
    %c0_i32 = arith.constant 0 : i32
    %c0_i32_0 = arith.constant 0 : i32
    %c0_i32_1 = arith.constant 0 : i32
    return %c0_i32, %c0_i32_0 : i32, i32
  }
  func.func @transform_3(%arg0: i32) -> (i32, i32) {
    %c0_i32 = arith.constant 0 : i32
    %c0_i32_0 = arith.constant 0 : i32
    %c0_i32_1 = arith.constant 0 : i32
    return %c0_i32, %c0_i32_0 : i32, i32
  }
  func.func @transform_4(%arg0: i32) -> (i32, i32) {
    %c0_i32 = arith.constant 0 : i32
    %c0_i32_0 = arith.constant 0 : i32
    %c0_i32_1 = arith.constant 0 : i32
    return %c0_i32, %c0_i32_0 : i32, i32
  }
  func.func @transform_5(%arg0: i32) -> (i32, i32) {
    %c0_i32 = arith.constant 0 : i32
    %c0_i32_0 = arith.constant 0 : i32
    return %arg0, %c0_i32 : i32, i32
  }
}

</mosaic_0001>

<llo_original>
// kernel: tpu_custom_call.1
$region0: #{tpu_custom_call.1}
  #allocation0 [shape = 'u32[]', space=smem, size = 0x4, offset = 0x4, fixed_abs, tag = 'smem constant byte address 0x4 - core index']
  #allocation1 [shape = 'u32[144,128]{1,0:T(1,128)}', space=vmem, size = 0x12000, scoped, tag = 'internal scratch']
  %s0 = inlined_call_operand.vmem [shape: f32[500,32], index: 0, kind: input, shape index: {}]
  %s1 = inlined_call_operand.vmem [shape: f32[32,64], index: 1, kind: input, shape index: {}]
  %s2 = inlined_call_operand.vmem [shape: f32[1,64], index: 2, kind: input, shape index: {}]
  %s3 = inlined_call_operand.vmem [shape: f32[64,16], index: 3, kind: input, shape index: {}]
  %s4 = inlined_call_operand.vmem [shape: f32[1,16], index: 4, kind: input, shape index: {}]
  %s5 = inlined_call_operand.vmem [shape: f32[500,16], index: 5, kind: output, shape index: {}]
  %s6 = sld [smem:[#allocation0]]
  $region101: #{tpu_custom_call.1} parent=0
    _
  %s8 = ssub.s32 1, %s6
  %s9 = scalar_select 0, %s8, %s6
  $region1: #{tpu_custom_call.1} parent=0
    #allocation2 [shape = 'u8[262144]{0}', space=vmem, size = 0x40000, scoped, tag = 'output window, operand 0']
    loop: start=0, step=1, limit=4
    $region2: #{tpu_custom_call.1} parent=1 // loop_pre_header
      _
    $region3: #{tpu_custom_call.1} parent=1 // loop_header
      %s11 = sphi 0, %s15
      %p12 = scmp.ge.s32.totalorder %s11, 4
      %s21 = sphi 0, %s23
      %s24 = sphi 0, %s21
      %s25 = sphi 0, %s24
      %s41 = sphi 0, %s25
      %s45 = sphi 0, %s45
      %s47 = sphi 0, %s45
      %s48 = sphi 0, %s47
      %s62 = sphi 0, %s48
      %s66 = sphi 0, %s66
      %s68 = sphi 0, %s66
      %s69 = sphi 0, %s68
      %s83 = sphi 0, %s69
      %s87 = sphi 0, %s87
      %s89 = sphi 0, %s87
      %s90 = sphi 0, %s89
      %s104 = sphi 0, %s90
      %s108 = sphi 0, %s108
      %s110 = sphi 0, %s108
      %s111 = sphi 0, %s110
      %s125 = sphi 0, %s111
      %s131 = sphi 0, %s133
      %s134 = sphi 0, %s131
      %s135 = sphi 0, %s134
      %s151 = sphi 0, %s135
    $region4: #{tpu_custom_call.1} parent=1 // loop_header_branch
      %14 = sbr.rel (%p12) target = $region8
    $region5: #{tpu_custom_call.1} parent=1 // loop_body
      %s16 = ssub.s32 %s11, 1
      %s17 = ssub.s32 %s11, 2
      %s18 = sadd.s32 %s11, 1
      %s19 = ssub.s32 %s11, %s18
      %p20 = scmp.eq.s32.totalorder %s19, 0
      %s22 = sadd.s32 %s21, 1
      %s23 = scalar_select %p20, %s21, %s22
      %p26 = pneg %p20
      %p27 = scmp.eq.s32.totalorder %s11, 1
      %p28 = por %p26, %p27
      %p29 = scmp.ne.s32.totalorder %s21, %s24
      %p30 = scmp.eq.s32.totalorder %s11, 0
      %p31 = por %p29, %p30
      %p32 = scmp.ne.s32.totalorder %s21, %s24
      %p33 = scmp.eq.s32.totalorder %s16, 1
      %p34 = por %p32, %p33
      %p35 = scmp.ne.s32.totalorder %s24, %s25
      %p36 = scmp.eq.s32.totalorder %s16, 0
      %p37 = por %p35, %p36
      %p38 = scmp.ne.s32.totalorder %s24, %s25
      %p39 = scmp.eq.s32.totalorder %s17, 1
      %p40 = por %p38, %p39
      %p42 = scmp.ne.s32.totalorder %s25, %s41
      %p43 = scmp.eq.s32.totalorder %s17, 0
      %p44 = por %p42, %p43
      %s46 = sadd.s32 %s45, 1
      %p49 = scmp.eq.s32.totalorder %s11, 1
      %p50 = scmp.ne.s32.totalorder %s45, %s47
      %p51 = scmp.eq.s32.totalorder %s11, 0
      %p52 = por %p50, %p51
      %p53 = scmp.ne.s32.totalorder %s45, %s47
      %p54 = scmp.eq.s32.totalorder %s16, 1
      %p55 = por %p53, %p54
      %p56 = scmp.ne.s32.totalorder %s47, %s48
      %p57 = scmp.eq.s32.totalorder %s16, 0
      %p58 = por %p56, %p57
      %p59 = scmp.ne.s32.totalorder %s47, %s48
      %p60 = scmp.eq.s32.totalorder %s17, 1
      %p61 = por %p59, %p60
      %p63 = scmp.ne.s32.totalorder %s48, %s62
      %p64 = scmp.eq.s32.totalorder %s17, 0
      %p65 = por %p63, %p64
      %s67 = sadd.s32 %s66, 1
      %p70 = scmp.eq.s32.totalorder %s11, 1
      %p71 = scmp.ne.s32.totalorder %s66, %s68
      %p72 = scmp.eq.s32.totalorder %s11, 0
      %p73 = por %p71, %p72
      %p74 = scmp.ne.s32.totalorder %s66, %s68
      %p75 = scmp.eq.s32.totalorder %s16, 1
      %p76 = por %p74, %p75
      %p77 = scmp.ne.s32.totalorder %s68, %s69
      %p78 = scmp.eq.s32.totalorder %s16, 0
      %p79 = por %p77, %p78
      %p80 = scmp.ne.s32.totalorder %s68, %s69
      %p81 = scmp.eq.s32.totalorder %s17, 1
      %p82 = por %p80, %p81
      %p84 = scmp.ne.s32.totalorder %s69, %s83
      %p85 = scmp.eq.s32.totalorder %s17, 0
      %p86 = por %p84, %p85
      %s88 = sadd.s32 %s87, 1
      %p91 = scmp.eq.s32.totalorder %s11, 1
      %p92 = scmp.ne.s32.totalorder %s87, %s89
      %p93 = scmp.eq.s32.totalorder %s11, 0
      %p94 = por %p92, %p93
      %p95 = scmp.ne.s32.totalorder %s87, %s89
      %p96 = scmp.eq.s32.totalorder %s16, 1
      %p97 = por %p95, %p96
      %p98 = scmp.ne.s32.totalorder %s89, %s90
      %p99 = scmp.eq.s32.totalorder %s16, 0
      %p100 = por %p98, %p99
      %p101 = scmp.ne.s32.totalorder %s89, %s90
      %p102 = scmp.eq.s32.totalorder %s17, 1
      %p103 = por %p101, %p102
      %p105 = scmp.ne.s32.totalorder %s90, %s104
      %p106 = scmp.eq.s32.totalorder %s17, 0
      %p107 = por %p105, %p106
      %s109 = sadd.s32 %s108, 1
      %p112 = scmp.eq.s32.totalorder %s11, 1
      %p113 = scmp.ne.s32.totalorder %s108, %s110
      %p114 = scmp.eq.s32.totalorder %s11, 0
      %p115 = por %p113, %p114
      %p116 = scmp.ne.s32.totalorder %s108, %s110
      %p117 = scmp.eq.s32.totalorder %s16, 1
      %p118 = por %p116, %p117
      %p119 = scmp.ne.s32.totalorder %s110, %s111
      %p120 = scmp.eq.s32.totalorder %s16, 0
      %p121 = por %p119, %p120
      %p122 = scmp.ne.s32.totalorder %s110, %s111
      %p123 = scmp.eq.s32.totalorder %s17, 1
      %p124 = por %p122, %p123
      %p126 = scmp.ne.s32.totalorder %s111, %s125
      %p127 = scmp.eq.s32.totalorder %s17, 0
      %p128 = por %p126, %p127
      %s129 = ssub.s32 %s11, %s18
      %p130 = scmp.eq.s32.totalorder %s129, 0
      %s132 = sadd.s32 %s131, 1
      %s133 = scalar_select %p130, %s131, %s132
      %p136 = pneg %p130
      %p137 = scmp.eq.s32.totalorder %s11, 1
      %p138 = por %p136, %p137
      %p139 = scmp.ne.s32.totalorder %s131, %s134
      %p140 = scmp.eq.s32.totalorder %s11, 0
      %p141 = por %p139, %p140
      %p142 = scmp.ne.s32.totalorder %s131, %s134
      %p143 = scmp.eq.s32.totalorder %s16, 1
      %p144 = por %p142, %p143
      %p145 = scmp.ne.s32.totalorder %s134, %s135
      %p146 = scmp.eq.s32.totalorder %s16, 0
      %p147 = por %p145, %p146
      %p148 = scmp.ne.s32.totalorder %s134, %s135
      %p149 = scmp.eq.s32.totalorder %s17, 1
      %p150 = por %p148, %p149
      %p152 = scmp.ne.s32.totalorder %s135, %s151
      %p153 = scmp.eq.s32.totalorder %s17, 0
      %p154 = por %p152, %p153
      %p155 = scmp.le.s32.totalorder 1, %s11
      %p156 = scmp.lt.s32.totalorder %s11, 3
      %p157 = pnand %p155, %p156
      %p158 = pneg %p157
      // Predicated region
      $region9: #{tpu_custom_call.1} parent=5 // pred_check
        _
      $region10: #{tpu_custom_call.1} parent=5 // pred_check_branch
        %160 = sbr.rel (%p157) target = $region12
      $region11: #{tpu_custom_call.1} parent=5 // pred_region
        %s161 = ssub.s32 %s11, 1
        // Predicated region
        $region13: #{tpu_custom_call.1} parent=11 // pred_check
          %p162 = pneg %p58
        $region14: #{tpu_custom_call.1} parent=11 // pred_check_branch
          %164 = sbr.rel (%p162) target = $region16
        $region15: #{tpu_custom_call.1} parent=11 // pred_region
          _
        $region16: #{tpu_custom_call.1} parent=11 // pred_fallthru
          _
        // Predicated region
        $region17: #{tpu_custom_call.1} parent=11 // pred_check
          %p165 = pneg %p79
        $region18: #{tpu_custom_call.1} parent=11 // pred_check_branch
          %167 = sbr.rel (%p165) target = $region20
        $region19: #{tpu_custom_call.1} parent=11 // pred_region
          _
        $region20: #{tpu_custom_call.1} parent=11 // pred_fallthru
          _
        // Predicated region
        $region21: #{tpu_custom_call.1} parent=11 // pred_check
          %p168 = pneg %p100
        $region22: #{tpu_custom_call.1} parent=11 // pred_check_branch
          %170 = sbr.rel (%p168) target = $region24
        $region23: #{tpu_custom_call.1} parent=11 // pred_region
          _
        $region24: #{tpu_custom_call.1} parent=11 // pred_fallthru
          _
        // Predicated region
        $region25: #{tpu_custom_call.1} parent=11 // pred_check
          %p171 = pneg %p121
        $region26: #{tpu_custom_call.1} parent=11 // pred_check_branch
          %173 = sbr.rel (%p171) target = $region28
        $region27: #{tpu_custom_call.1} parent=11 // pred_region
          _
        $region28: #{tpu_custom_call.1} parent=11 // pred_fallthru
          _
      $region12: #{tpu_custom_call.1} parent=5 // pred_fallthru
        _
      %p174 = scmp.lt.s32.totalorder %s11, 2
      // Predicated region
      $region29: #{tpu_custom_call.1} parent=5 // pred_check
        %p175 = pneg %p174
      $region30: #{tpu_custom_call.1} parent=5 // pred_check_branch
        %177 = sbr.rel (%p175) target = $region32
      $region31: #{tpu_custom_call.1} parent=5 // pred_region
        // Predicated region
        $region33: #{tpu_custom_call.1} parent=31 // pred_check
          %p178 = pneg %p31
        $region34: #{tpu_custom_call.1} parent=31 // pred_check_branch
          %180 = sbr.rel (%p178) target = $region36
        $region35: #{tpu_custom_call.1} parent=31 // pred_region
          %s181 = smul.u32 32, %s11
          %s182 = ssub.s32 63, %s181
          %p183 = scmp.lt.s32.totalorder %s182, 32
          %s184 = scalar_select %p183, %s182, 32
          %s185 = smul.u32 128, %s184
          %p186 = scmp.lt.s32.totalorder %s181, 62
          %s187 = scalar_select %p186, %s181, 62
          %s188 = smul.addr %s187, 8
          %s189 = scalar_lea.vmem %s0, %s188
          %s190 = smul.u32 32, %s11
          %s191 = ssub.s32 63, %s190
          %p192 = scmp.lt.s32.totalorder %s191, 32
          %s193 = scalar_select %p192, %s191, 32
          %s194 = smul.u32 128, %s193
        $region36: #{tpu_custom_call.1} parent=31 // pred_fallthru
          _
      $region32: #{tpu_custom_call.1} parent=5 // pred_fallthru
        _
      %p195 = scmp.le.s32.totalorder 1, %s11
      %p196 = scmp.lt.s32.totalorder %s11, 3
      %p197 = pnand %p195, %p196
      %p198 = pneg %p197
      // Predicated region
      $region37: #{tpu_custom_call.1} parent=5 // pred_check
        _
      $region38: #{tpu_custom_call.1} parent=5 // pred_check_branch
        %200 = sbr.rel (%p197) target = $region40
      $region39: #{tpu_custom_call.1} parent=5 // pred_region
        %s201 = ssub.s32 %s11, 1
        %s202 = smul.u32 32, %s16
        %s203 = ssub.s32 63, %s202
        %p204 = scmp.lt.s32.totalorder %s203, 32
        %s205 = scalar_select %p204, %s203, 32
        %s206 = smul.u32 128, %s205
        %p207 = scmp.lt.s32.totalorder %s202, 62
        %s208 = scalar_select %p207, %s202, 62
        %s209 = smul.addr %s208, 8
        %s210 = scalar_lea.vmem %s0, %s209
        %p211 = pneg %p37
        %p212 = pneg %p34
        %p213 = pneg %p58
        %p214 = pneg %p55
        %p215 = pneg %p79
        %p216 = pneg %p76
        %p217 = pneg %p100
        %p218 = pneg %p97
        %p219 = pneg %p121
        %p220 = pneg %p118
        %p221 = pneg %p147
        %p222 = pneg %p144
        %s223 = sand.u32 %s134, 1
        %s224 = sand.u32 %s134, 1
        %s225 = smul.addr %s224, 256
        %s226 = scalar_lea.vmem [#allocation2], %s225
        %s227 = smul.u32 32, %s16
        %s228 = ssub.s32 63, %s227
        %p229 = scmp.lt.s32.totalorder %s228, 32
        %s230 = scalar_select %p229, %s228, 32
        %s231 = smul.u32 128, %s230
        %p232 = scmp.lt.s32.totalorder %s227, 62
        %s233 = scalar_select %p232, %s227, 62
        %s234 = smul.addr %s233, 8
        %s235 = scalar_lea.vmem %s0, %s234
        %s236 = smul.u32 32, %s16
        %s237 = ssub.s32 63, %s236
        %p238 = scmp.lt.s32.totalorder %s237, 32
        %s239 = scalar_select %p238, %s237, 32
        %s240 = smul.u32 128, %s239
        %s241 = smul.u32 32, %s16
        %s242 = ssub.s32 63, %s241
        %p243 = scmp.lt.s32.totalorder %s242, 32
        %s244 = scalar_select %p243, %s242, 32
        %s245 = smul.u32 128, %s244
        %v246 = vld [vmem:[%s235] sm:$0xff]
        %v247 = vld [vmem:[%s235 + $0x8] sm:$0xff]
        %v248 = vld [vmem:[%s235 + $0x10] sm:$0xff]
        %v249 = vld [vmem:[%s235 + $0x18] sm:$0xff]
        %v250 = vld [vmem:[%s235 + $0x20] sm:$0xff]
        %v251 = vld [vmem:[%s235 + $0x28] sm:$0xff]
        %v252 = vld [vmem:[%s235 + $0x30] sm:$0xff]
        %v253 = vld [vmem:[%s235 + $0x38] sm:$0xff]
        %v254 = vld [vmem:[%s235 + $0x40] sm:$0xff]
        %v255 = vld [vmem:[%s235 + $0x48] sm:$0xff]
        %v256 = vld [vmem:[%s235 + $0x50] sm:$0xff]
        %v257 = vld [vmem:[%s235 + $0x58] sm:$0xff]
        %v258 = vld [vmem:[%s235 + $0x60] sm:$0xff]
        %v259 = vld [vmem:[%s235 + $0x68] sm:$0xff]
        %v260 = vld [vmem:[%s235 + $0x70] sm:$0xff]
        %v261 = vld [vmem:[%s235 + $0x78] sm:$0xff]
        %v262 = vld [vmem:[%s235 + $0x80] sm:$0xff]
        %v263 = vld [vmem:[%s235 + $0x88] sm:$0xff]
        %v264 = vld [vmem:[%s235 + $0x90] sm:$0xff]
        %v265 = vld [vmem:[%s235 + $0x98] sm:$0xff]
        %v266 = vld [vmem:[%s235 + $0xa0] sm:$0xff]
        %v267 = vld [vmem:[%s235 + $0xa8] sm:$0xff]
        %v268 = vld [vmem:[%s235 + $0xb0] sm:$0xff]
        %v269 = vld [vmem:[%s235 + $0xb8] sm:$0xff]
        %v270 = vld [vmem:[%s235 + $0xc0] sm:$0xff]
        %v271 = vld [vmem:[%s235 + $0xc8] sm:$0xff]
        %v272 = vld [vmem:[%s235 + $0xd0] sm:$0xff]
        %v273 = vld [vmem:[%s235 + $0xd8] sm:$0xff]
        %v274 = vld [vmem:[%s235 + $0xe0] sm:$0xff]
        %v275 = vld [vmem:[%s235 + $0xe8] sm:$0xff]
        %v276 = vld [vmem:[%s235 + $0xf0] sm:$0xff]
        %v277 = vld [vmem:[%s235 + $0xf8] sm:$0xff]
        %v278 = vld [vmem:[%s1] sm:$0xff]
        %v279 = vld [vmem:[%s1 + $0x8] sm:$0xff]
        %v280 = vld [vmem:[%s1 + $0x10] sm:$0xff]
        %v281 = vld [vmem:[%s1 + $0x18] sm:$0xff]
        %v282 = vld [vmem:[%s2] sm:$0x1]
        %v284 = vlaneseq
        %v285 = vshrl.u32 %v284, 7
        %v286 = vsub.s32 0, %v285
        %v287 = vrot.slane %v282, %v286
        %vm289 = vcmask 261120
        %v291 = vsel %vm289, %v246, 0
        %v294 = vsel %vm289, %v247, 0
        %v297 = vsel %vm289, %v248, 0
        %v300 = vsel %vm289, %v249, 0
        %v303 = vsel %vm289, %v250, 0
        %v306 = vsel %vm289, %v251, 0
        %v309 = vsel %vm289, %v252, 0
        %v312 = vsel %vm289, %v253, 0
        %v315 = vsel %vm289, %v254, 0
        %v318 = vsel %vm289, %v255, 0
        %v321 = vsel %vm289, %v256, 0
        %v324 = vsel %vm289, %v257, 0
        %v327 = vsel %vm289, %v258, 0
        %v330 = vsel %vm289, %v259, 0
        %v333 = vsel %vm289, %v260, 0
        %v336 = vsel %vm289, %v261, 0
        %v339 = vsel %vm289, %v262, 0
        %v342 = vsel %vm289, %v263, 0
        %v345 = vsel %vm289, %v264, 0
        %v348 = vsel %vm289, %v265, 0
        %v351 = vsel %vm289, %v266, 0
        %v354 = vsel %vm289, %v267, 0
        %v357 = vsel %vm289, %v268, 0
        %v360 = vsel %vm289, %v269, 0
        %v363 = vsel %vm289, %v270, 0
        %v366 = vsel %vm289, %v271, 0
        %v369 = vsel %vm289, %v272, 0
        %v372 = vsel %vm289, %v273, 0
        %v375 = vsel %vm289, %v274, 0
        %v378 = vsel %vm289, %v275, 0
        %v381 = vsel %vm289, %v276, 0
        %v384 = vsel %vm289, %v277, 0
        %386 = vmatprep.subr.mxu0 0.0
        %387 = vmatpush1.msra.mxu0 0.0
        %388 = vmatprep.subr.mxu0 0.0
        %389 = vmatpush1.msra.mxu0 0.0
        %390 = vmatprep.subr.mxu0 0.0
        %391 = vmatpush1.msra.mxu0 0.0
        %392 = vmatprep.subr.mxu0 0.0
        %393 = vmatpush1.msra.mxu0 0.0
        %394 = vmatprep.subr.mxu0 0.0
        %395 = vmatpush1.msra.mxu0 0.0
        %396 = vmatprep.subr.mxu0 0.0
        %397 = vmatpush1.msra.mxu0 0.0
        %398 = vmatprep.subr.mxu0 0.0
        %399 = vmatpush1.msra.mxu0 0.0
        %400 = vmatprep.subr.mxu0 0.0
        %401 = vmatpush1.msra.mxu0 0.0
        %402 = vmatprep.subr.mxu0 0.0
        %403 = vmatpush1.msra.mxu0 0.0
        %404 = vmatprep.subr.mxu0 0.0
        %405 = vmatpush1.msra.mxu0 0.0
        %406 = vmatprep.subr.mxu0 0.0
        %407 = vmatpush1.msra.mxu0 0.0
        %408 = vmatprep.subr.mxu0 0.0
        %409 = vmatpush1.msra.mxu0 0.0
        %410 = vmatprep.subr.mxu0 0.0
        %411 = vmatpush1.msra.mxu0 %v281
        %412 = vmatprep.subr.mxu0 0.0
        %413 = vmatpush1.msra.mxu0 %v280
        %414 = vmatprep.subr.mxu0 0.0
        %415 = vmatpush1.msra.mxu0 %v279
        %416 = vmatprep.subr.mxu0 0.0
        %417 = vmatpush1.msra.mxu0 %v278
        %418 = vmatprep.subr.mxu0 0.0
        %419 = vmatpush2.msra.mxu0 0.0
        %420 = vmatprep.subr.mxu0 0.0
        %421 = vmatpush2.msra.mxu0 0.0
        %422 = vmatprep.subr.mxu0 0.0
        %423 = vmatpush2.msra.mxu0 0.0
        %424 = vmatprep.subr.mxu0 0.0
        %425 = vmatpush2.msra.mxu0 0.0
        %426 = vmatprep.subr.mxu0 0.0
        %427 = vmatpush2.msra.mxu0 0.0
        %428 = vmatprep.subr.mxu0 0.0
        %429 = vmatpush2.msra.mxu0 0.0
        %430 = vmatprep.subr.mxu0 0.0
        %431 = vmatpush2.msra.mxu0 0.0
        %432 = vmatprep.subr.mxu0 0.0
        %433 = vmatpush2.msra.mxu0 0.0
        %434 = vmatprep.subr.mxu0 0.0
        %435 = vmatpush2.msra.mxu0 0.0
        %436 = vmatprep.subr.mxu0 0.0
        %437 = vmatpush2.msra.mxu0 0.0
        %438 = vmatprep.subr.mxu0 0.0
        %439 = vmatpush2.msra.mxu0 0.0
        %440 = vmatprep.subr.mxu0 0.0
        %441 = vmatpush2.msra.mxu0 0.0
        %442 = vmatprep.subr.mxu0 0.0
        %443 = vmatpush2.msra.mxu0 0.0
        %444 = vmatprep.subr.mxu0 0.0
        %445 = vmatpush2.msra.mxu0 0.0
        %446 = vmatprep.subr.mxu0 0.0
        %447 = vmatpush2.msra.mxu0 0.0
        %448 = vmatprep.subr.mxu0 0.0
        %449 = vmatpush2.msra.mxu0 0.0
        %450 = vmatprep.mubr.f32.mxu0 0.0
        %451 = vmatmul.mubr.f32.gmra.mxu0 %v291
        %v452 = vpop.f32.mrf.mxu0
        %v453 = vadd.f32 %v287, %v452
        %v454 = vpop.f32.mrf.mxu0
        %455 = vmatprep.mubr.f32.mxu0 0.0
        %456 = vmatmul.mubr.f32.gmra.mxu0 %v294
        %v457 = vpop.f32.mrf.mxu0
        %v458 = vadd.f32 %v287, %v457
        %v459 = vpop.f32.mrf.mxu0
        %460 = vmatprep.mubr.f32.mxu0 0.0
        %461 = vmatmul.mubr.f32.gmra.mxu0 %v297
        %v462 = vpop.f32.mrf.mxu0
        %v463 = vadd.f32 %v287, %v462
        %v464 = vpop.f32.mrf.mxu0
        %465 = vmatprep.mubr.f32.mxu0 0.0
        %466 = vmatmul.mubr.f32.gmra.mxu0 %v300
        %v467 = vpop.f32.mrf.mxu0
        %v468 = vadd.f32 %v287, %v467
        %v469 = vpop.f32.mrf.mxu0
        %470 = vmatprep.mubr.f32.mxu0 0.0
        %471 = vmatmul.mubr.f32.gmra.mxu0 %v303
        %v472 = vpop.f32.mrf.mxu0
        %v473 = vadd.f32 %v287, %v472
        %v474 = vpop.f32.mrf.mxu0
        %475 = vmatprep.mubr.f32.mxu0 0.0
        %476 = vmatmul.mubr.f32.gmra.mxu0 %v306
        %v477 = vpop.f32.mrf.mxu0
        %v478 = vadd.f32 %v287, %v477
        %v479 = vpop.f32.mrf.mxu0
        %480 = vmatprep.mubr.f32.mxu0 0.0
        %481 = vmatmul.mubr.f32.gmra.mxu0 %v309
        %v482 = vpop.f32.mrf.mxu0
        %v483 = vadd.f32 %v287, %v482
        %v484 = vpop.f32.mrf.mxu0
        %485 = vmatprep.mubr.f32.mxu0 0.0
        %486 = vmatmul.mubr.f32.gmra.mxu0 %v312
        %v487 = vpop.f32.mrf.mxu0
        %v488 = vadd.f32 %v287, %v487
        %v489 = vpop.f32.mrf.mxu0
        %490 = vmatprep.mubr.f32.mxu0 0.0
        %491 = vmatmul.mubr.f32.gmra.mxu0 %v315
        %v492 = vpop.f32.mrf.mxu0
        %v493 = vadd.f32 %v287, %v492
        %v494 = vpop.f32.mrf.mxu0
        %495 = vmatprep.mubr.f32.mxu0 0.0
        %496 = vmatmul.mubr.f32.gmra.mxu0 %v318
        %v497 = vpop.f32.mrf.mxu0
        %v498 = vadd.f32 %v287, %v497
        %v499 = vpop.f32.mrf.mxu0
        %500 = vmatprep.mubr.f32.mxu0 0.0
        %501 = vmatmul.mubr.f32.gmra.mxu0 %v321
        %v502 = vpop.f32.mrf.mxu0
        %v503 = vadd.f32 %v287, %v502
        %v504 = vpop.f32.mrf.mxu0
        %505 = vmatprep.mubr.f32.mxu0 0.0
        %506 = vmatmul.mubr.f32.gmra.mxu0 %v324
        %v507 = vpop.f32.mrf.mxu0
        %v508 = vadd.f32 %v287, %v507
        %v509 = vpop.f32.mrf.mxu0
        %510 = vmatprep.mubr.f32.mxu0 0.0
        %511 = vmatmul.mubr.f32.gmra.mxu0 %v327
        %v512 = vpop.f32.mrf.mxu0
        %v513 = vadd.f32 %v287, %v512
        %v514 = vpop.f32.mrf.mxu0
        %515 = vmatprep.mubr.f32.mxu0 0.0
        %516 = vmatmul.mubr.f32.gmra.mxu0 %v330
        %v517 = vpop.f32.mrf.mxu0
        %v518 = vadd.f32 %v287, %v517
        %v519 = vpop.f32.mrf.mxu0
        %520 = vmatprep.mubr.f32.mxu0 0.0
        %521 = vmatmul.mubr.f32.gmra.mxu0 %v333
        %v522 = vpop.f32.mrf.mxu0
        %v523 = vadd.f32 %v287, %v522
        %v524 = vpop.f32.mrf.mxu0
        %525 = vmatprep.mubr.f32.mxu0 0.0
        %526 = vmatmul.mubr.f32.gmra.mxu0 %v336
        %v527 = vpop.f32.mrf.mxu0
        %v528 = vadd.f32 %v287, %v527
        %v529 = vpop.f32.mrf.mxu0
        %530 = vmatprep.mubr.f32.mxu0 0.0
        %531 = vmatmul.mubr.f32.gmra.mxu0 %v339
        %v532 = vpop.f32.mrf.mxu0
        %v533 = vadd.f32 %v287, %v532
        %v534 = vpop.f32.mrf.mxu0
        %535 = vmatprep.mubr.f32.mxu0 0.0
        %536 = vmatmul.mubr.f32.gmra.mxu0 %v342
        %v537 = vpop.f32.mrf.mxu0
        %v538 = vadd.f32 %v287, %v537
        %v539 = vpop.f32.mrf.mxu0
        %540 = vmatprep.mubr.f32.mxu0 0.0
        %541 = vmatmul.mubr.f32.gmra.mxu0 %v345
        %v542 = vpop.f32.mrf.mxu0
        %v543 = vadd.f32 %v287, %v542
        %v544 = vpop.f32.mrf.mxu0
        %545 = vmatprep.mubr.f32.mxu0 0.0
        %546 = vmatmul.mubr.f32.gmra.mxu0 %v348
        %v547 = vpop.f32.mrf.mxu0
        %v548 = vadd.f32 %v287, %v547
        %v549 = vpop.f32.mrf.mxu0
        %550 = vmatprep.mubr.f32.mxu0 0.0
        %551 = vmatmul.mubr.f32.gmra.mxu0 %v351
        %v552 = vpop.f32.mrf.mxu0
        %v553 = vadd.f32 %v287, %v552
        %v554 = vpop.f32.mrf.mxu0
        %555 = vmatprep.mubr.f32.mxu0 0.0
        %556 = vmatmul.mubr.f32.gmra.mxu0 %v354
        %v557 = vpop.f32.mrf.mxu0
        %v558 = vadd.f32 %v287, %v557
        %v559 = vpop.f32.mrf.mxu0
        %560 = vmatprep.mubr.f32.mxu0 0.0
        %561 = vmatmul.mubr.f32.gmra.mxu0 %v357
        %v562 = vpop.f32.mrf.mxu0
        %v563 = vadd.f32 %v287, %v562
        %v564 = vpop.f32.mrf.mxu0
        %565 = vmatprep.mubr.f32.mxu0 0.0
        %566 = vmatmul.mubr.f32.gmra.mxu0 %v360
        %v567 = vpop.f32.mrf.mxu0
        %v568 = vadd.f32 %v287, %v567
        %v569 = vpop.f32.mrf.mxu0
        %570 = vmatprep.mubr.f32.mxu0 0.0
        %571 = vmatmul.mubr.f32.gmra.mxu0 %v363
        %v572 = vpop.f32.mrf.mxu0
        %v573 = vadd.f32 %v287, %v572
        %v574 = vpop.f32.mrf.mxu0
        %575 = vmatprep.mubr.f32.mxu0 0.0
        %576 = vmatmul.mubr.f32.gmra.mxu0 %v366
        %v577 = vpop.f32.mrf.mxu0
        %v578 = vadd.f32 %v287, %v577
        %v579 = vpop.f32.mrf.mxu0
        %580 = vmatprep.mubr.f32.mxu0 0.0
        %581 = vmatmul.mubr.f32.gmra.mxu0 %v369
        %v582 = vpop.f32.mrf.mxu0
        %v583 = vadd.f32 %v287, %v582
        %v584 = vpop.f32.mrf.mxu0
        %585 = vmatprep.mubr.f32.mxu0 0.0
        %586 = vmatmul.mubr.f32.gmra.mxu0 %v372
        %v587 = vpop.f32.mrf.mxu0
        %v588 = vadd.f32 %v287, %v587
        %v589 = vpop.f32.mrf.mxu0
        %590 = vmatprep.mubr.f32.mxu0 0.0
        %591 = vmatmul.mubr.f32.gmra.mxu0 %v375
        %v592 = vpop.f32.mrf.mxu0
        %v593 = vadd.f32 %v287, %v592
        %v594 = vpop.f32.mrf.mxu0
        %595 = vmatprep.mubr.f32.mxu0 0.0
        %596 = vmatmul.mubr.f32.gmra.mxu0 %v378
        %v597 = vpop.f32.mrf.mxu0
        %v598 = vadd.f32 %v287, %v597
        %v599 = vpop.f32.mrf.mxu0
        %600 = vmatprep.mubr.f32.mxu0 0.0
        %601 = vmatmul.mubr.f32.gmra.mxu0 %v381
        %v602 = vpop.f32.mrf.mxu0
        %v603 = vadd.f32 %v287, %v602
        %v604 = vpop.f32.mrf.mxu0
        %605 = vmatprep.mubr.f32.mxu0 0.0
        %606 = vmatmul.mubr.f32.gmra.mxu0 %v384
        %v607 = vpop.f32.mrf.mxu0
        %v608 = vadd.f32 %v287, %v607
        %v609 = vpop.f32.mrf.mxu0
        %610 = vdwg.mxu0
        %v611 = vtanh.pop %v453
        %v612 = vtanh.pop %v458
        %v613 = vtanh.pop %v463
        %v614 = vtanh.pop %v468
        %v615 = vtanh.pop %v473
        %v616 = vtanh.pop %v478
        %v617 = vtanh.pop %v483
        %v618 = vtanh.pop %v488
        %v619 = vtanh.pop %v493
        %v620 = vtanh.pop %v498
        %v621 = vtanh.pop %v503
        %v622 = vtanh.pop %v508
        %v623 = vtanh.pop %v513
        %v624 = vtanh.pop %v518
        %v625 = vtanh.pop %v523
        %v626 = vtanh.pop %v528
        %v627 = vtanh.pop %v533
        %v628 = vtanh.pop %v538
        %v629 = vtanh.pop %v543
        %v630 = vtanh.pop %v548
        %v631 = vtanh.pop %v553
        %v632 = vtanh.pop %v558
        %v633 = vtanh.pop %v563
        %v634 = vtanh.pop %v568
        %v635 = vtanh.pop %v573
        %v636 = vtanh.pop %v578
        %v637 = vtanh.pop %v583
        %v638 = vtanh.pop %v588
        %v639 = vtanh.pop %v593
        %v640 = vtanh.pop %v598
        %v641 = vtanh.pop %v603
        %v642 = vtanh.pop %v608
        %v643 = vld [vmem:[%s3] sm:$0xff]
        %v644 = vld [vmem:[%s3 + $0x8] sm:$0xff]
        %v645 = vld [vmem:[%s3 + $0x10] sm:$0xff]
        %v646 = vld [vmem:[%s3 + $0x18] sm:$0xff]
        %v647 = vld [vmem:[%s3 + $0x20] sm:$0xff]
        %v648 = vld [vmem:[%s3 + $0x28] sm:$0xff]
        %v649 = vld [vmem:[%s3 + $0x30] sm:$0xff]
        %v650 = vld [vmem:[%s3 + $0x38] sm:$0xff]
        %v651 = vld [vmem:[%s4] sm:$0x1]
        %v653 = vlaneseq
        %v654 = vshrl.u32 %v653, 7
        %v655 = vsub.s32 0, %v654
        %v656 = vrot.slane %v651, %v655
        %vm658 = vcmask 523264
        %v660 = vsel %vm658, %v611, 0
        %v663 = vsel %vm658, %v612, 0
        %v666 = vsel %vm658, %v613, 0
        %v669 = vsel %vm658, %v614, 0
        %v672 = vsel %vm658, %v615, 0
        %v675 = vsel %vm658, %v616, 0
        %v678 = vsel %vm658, %v617, 0
        %v681 = vsel %vm658, %v618, 0
        %v684 = vsel %vm658, %v619, 0
        %v687 = vsel %vm658, %v620, 0
        %v690 = vsel %vm658, %v621, 0
        %v693 = vsel %vm658, %v622, 0
        %v696 = vsel %vm658, %v623, 0
        %v699 = vsel %vm658, %v624, 0
        %v702 = vsel %vm658, %v625, 0
        %v705 = vsel %vm658, %v626, 0
        %v708 = vsel %vm658, %v627, 0
        %v711 = vsel %vm658, %v628, 0
        %v714 = vsel %vm658, %v629, 0
        %v717 = vsel %vm658, %v630, 0
        %v720 = vsel %vm658, %v631, 0
        %v723 = vsel %vm658, %v632, 0
        %v726 = vsel %vm658, %v633, 0
        %v729 = vsel %vm658, %v634, 0
        %v732 = vsel %vm658, %v635, 0
        %v735 = vsel %vm658, %v636, 0
        %v738 = vsel %vm658, %v637, 0
        %v741 = vsel %vm658, %v638, 0
        %v744 = vsel %vm658, %v639, 0
        %v747 = vsel %vm658, %v640, 0
        %v750 = vsel %vm658, %v641, 0
        %v753 = vsel %vm658, %v642, 0
        %755 = vmatprep.subr.mxu0 0.0
        %756 = vmatpush1.msra.mxu0 0.0
        %757 = vmatprep.subr.mxu0 0.0
        %758 = vmatpush1.msra.mxu0 0.0
        %759 = vmatprep.subr.mxu0 0.0
        %760 = vmatpush1.msra.mxu0 0.0
        %761 = vmatprep.subr.mxu0 0.0
        %762 = vmatpush1.msra.mxu0 0.0
        %763 = vmatprep.subr.mxu0 0.0
        %764 = vmatpush1.msra.mxu0 0.0
        %765 = vmatprep.subr.mxu0 0.0
        %766 = vmatpush1.msra.mxu0 0.0
        %767 = vmatprep.subr.mxu0 0.0
        %768 = vmatpush1.msra.mxu0 0.0
        %769 = vmatprep.subr.mxu0 0.0
        %770 = vmatpush1.msra.mxu0 0.0
        %771 = vmatprep.subr.mxu0 0.0
        %772 = vmatpush1.msra.mxu0 %v650
        %773 = vmatprep.subr.mxu0 0.0
        %774 = vmatpush1.msra.mxu0 %v649
        %775 = vmatprep.subr.mxu0 0.0
        %776 = vmatpush1.msra.mxu0 %v648
        %777 = vmatprep.subr.mxu0 0.0
        %778 = vmatpush1.msra.mxu0 %v647
        %779 = vmatprep.subr.mxu0 0.0
        %780 = vmatpush1.msra.mxu0 %v646
        %781 = vmatprep.subr.mxu0 0.0
        %782 = vmatpush1.msra.mxu0 %v645
        %783 = vmatprep.subr.mxu0 0.0
        %784 = vmatpush1.msra.mxu0 %v644
        %785 = vmatprep.subr.mxu0 0.0
        %786 = vmatpush1.msra.mxu0 %v643
        %787 = vmatprep.subr.mxu0 0.0
        %788 = vmatpush2.msra.mxu0 0.0
        %789 = vmatprep.subr.mxu0 0.0
        %790 = vmatpush2.msra.mxu0 0.0
        %791 = vmatprep.subr.mxu0 0.0
        %792 = vmatpush2.msra.mxu0 0.0
        %793 = vmatprep.subr.mxu0 0.0
        %794 = vmatpush2.msra.mxu0 0.0
        %795 = vmatprep.subr.mxu0 0.0
        %796 = vmatpush2.msra.mxu0 0.0
        %797 = vmatprep.subr.mxu0 0.0
        %798 = vmatpush2.msra.mxu0 0.0
        %799 = vmatprep.subr.mxu0 0.0
        %800 = vmatpush2.msra.mxu0 0.0
        %801 = vmatprep.subr.mxu0 0.0
        %802 = vmatpush2.msra.mxu0 0.0
        %803 = vmatprep.subr.mxu0 0.0
        %804 = vmatpush2.msra.mxu0 0.0
        %805 = vmatprep.subr.mxu0 0.0
        %806 = vmatpush2.msra.mxu0 0.0
        %807 = vmatprep.subr.mxu0 0.0
        %808 = vmatpush2.msra.mxu0 0.0
        %809 = vmatprep.subr.mxu0 0.0
        %810 = vmatpush2.msra.mxu0 0.0
        %811 = vmatprep.subr.mxu0 0.0
        %812 = vmatpush2.msra.mxu0 0.0
        %813 = vmatprep.subr.mxu0 0.0
        %814 = vmatpush2.msra.mxu0 0.0
        %815 = vmatprep.subr.mxu0 0.0
        %816 = vmatpush2.msra.mxu0 0.0
        %817 = vmatprep.subr.mxu0 0.0
        %818 = vmatpush2.msra.mxu0 0.0
        %819 = vmatprep.mubr.f32.mxu0 0.0
        %820 = vmatmul.mubr.f32.gmra.mxu0 %v660
        %v821 = vpop.f32.mrf.mxu0
        %v822 = vadd.f32 %v656, %v821
        %v823 = vpop.f32.mrf.mxu0
        %824 = vmatprep.mubr.f32.mxu0 0.0
        %825 = vmatmul.mubr.f32.gmra.mxu0 %v663
        %v826 = vpop.f32.mrf.mxu0
        %v827 = vadd.f32 %v656, %v826
        %v828 = vpop.f32.mrf.mxu0
        %829 = vmatprep.mubr.f32.mxu0 0.0
        %830 = vmatmul.mubr.f32.gmra.mxu0 %v666
        %v831 = vpop.f32.mrf.mxu0
        %v832 = vadd.f32 %v656, %v831
        %v833 = vpop.f32.mrf.mxu0
        %834 = vmatprep.mubr.f32.mxu0 0.0
        %835 = vmatmul.mubr.f32.gmra.mxu0 %v669
        %v836 = vpop.f32.mrf.mxu0
        %v837 = vadd.f32 %v656, %v836
        %v838 = vpop.f32.mrf.mxu0
        %839 = vmatprep.mubr.f32.mxu0 0.0
        %840 = vmatmul.mubr.f32.gmra.mxu0 %v672
        %v841 = vpop.f32.mrf.mxu0
        %v842 = vadd.f32 %v656, %v841
        %v843 = vpop.f32.mrf.mxu0
        %844 = vmatprep.mubr.f32.mxu0 0.0
        %845 = vmatmul.mubr.f32.gmra.mxu0 %v675
        %v846 = vpop.f32.mrf.mxu0
        %v847 = vadd.f32 %v656, %v846
        %v848 = vpop.f32.mrf.mxu0
        %849 = vmatprep.mubr.f32.mxu0 0.0
        %850 = vmatmul.mubr.f32.gmra.mxu0 %v678
        %v851 = vpop.f32.mrf.mxu0
        %v852 = vadd.f32 %v656, %v851
        %v853 = vpop.f32.mrf.mxu0
        %854 = vmatprep.mubr.f32.mxu0 0.0
        %855 = vmatmul.mubr.f32.gmra.mxu0 %v681
        %v856 = vpop.f32.mrf.mxu0
        %v857 = vadd.f32 %v656, %v856
        %v858 = vpop.f32.mrf.mxu0
        %859 = vmatprep.mubr.f32.mxu0 0.0
        %860 = vmatmul.mubr.f32.gmra.mxu0 %v684
        %v861 = vpop.f32.mrf.mxu0
        %v862 = vadd.f32 %v656, %v861
        %v863 = vpop.f32.mrf.mxu0
        %864 = vmatprep.mubr.f32.mxu0 0.0
        %865 = vmatmul.mubr.f32.gmra.mxu0 %v687
        %v866 = vpop.f32.mrf.mxu0
        %v867 = vadd.f32 %v656, %v866
        %v868 = vpop.f32.mrf.mxu0
        %869 = vmatprep.mubr.f32.mxu0 0.0
        %870 = vmatmul.mubr.f32.gmra.mxu0 %v690
        %v871 = vpop.f32.mrf.mxu0
        %v872 = vadd.f32 %v656, %v871
        %v873 = vpop.f32.mrf.mxu0
        %874 = vmatprep.mubr.f32.mxu0 0.0
        %875 = vmatmul.mubr.f32.gmra.mxu0 %v693
        %v876 = vpop.f32.mrf.mxu0
        %v877 = vadd.f32 %v656, %v876
        %v878 = vpop.f32.mrf.mxu0
        %879 = vmatprep.mubr.f32.mxu0 0.0
        %880 = vmatmul.mubr.f32.gmra.mxu0 %v696
        %v881 = vpop.f32.mrf.mxu0
        %v882 = vadd.f32 %v656, %v881
        %v883 = vpop.f32.mrf.mxu0
        %884 = vmatprep.mubr.f32.mxu0 0.0
        %885 = vmatmul.mubr.f32.gmra.mxu0 %v699
        %v886 = vpop.f32.mrf.mxu0
        %v887 = vadd.f32 %v656, %v886
        %v888 = vpop.f32.mrf.mxu0
        %889 = vmatprep.mubr.f32.mxu0 0.0
        %890 = vmatmul.mubr.f32.gmra.mxu0 %v702
        %v891 = vpop.f32.mrf.mxu0
        %v892 = vadd.f32 %v656, %v891
        %v893 = vpop.f32.mrf.mxu0
        %894 = vmatprep.mubr.f32.mxu0 0.0
        %895 = vmatmul.mubr.f32.gmra.mxu0 %v705
        %v896 = vpop.f32.mrf.mxu0
        %v897 = vadd.f32 %v656, %v896
        %v898 = vpop.f32.mrf.mxu0
        %899 = vmatprep.mubr.f32.mxu0 0.0
        %900 = vmatmul.mubr.f32.gmra.mxu0 %v708
        %v901 = vpop.f32.mrf.mxu0
        %v902 = vadd.f32 %v656, %v901
        %v903 = vpop.f32.mrf.mxu0
        %904 = vmatprep.mubr.f32.mxu0 0.0
        %905 = vmatmul.mubr.f32.gmra.mxu0 %v711
        %v906 = vpop.f32.mrf.mxu0
        %v907 = vadd.f32 %v656, %v906
        %v908 = vpop.f32.mrf.mxu0
        %909 = vmatprep.mubr.f32.mxu0 0.0
        %910 = vmatmul.mubr.f32.gmra.mxu0 %v714
        %v911 = vpop.f32.mrf.mxu0
        %v912 = vadd.f32 %v656, %v911
        %v913 = vpop.f32.mrf.mxu0
        %914 = vmatprep.mubr.f32.mxu0 0.0
        %915 = vmatmul.mubr.f32.gmra.mxu0 %v717
        %v916 = vpop.f32.mrf.mxu0
        %v917 = vadd.f32 %v656, %v916
        %v918 = vpop.f32.mrf.mxu0
        %919 = vmatprep.mubr.f32.mxu0 0.0
        %920 = vmatmul.mubr.f32.gmra.mxu0 %v720
        %v921 = vpop.f32.mrf.mxu0
        %v922 = vadd.f32 %v656, %v921
        %v923 = vpop.f32.mrf.mxu0
        %924 = vmatprep.mubr.f32.mxu0 0.0
        %925 = vmatmul.mubr.f32.gmra.mxu0 %v723
        %v926 = vpop.f32.mrf.mxu0
        %v927 = vadd.f32 %v656, %v926
        %v928 = vpop.f32.mrf.mxu0
        %929 = vmatprep.mubr.f32.mxu0 0.0
        %930 = vmatmul.mubr.f32.gmra.mxu0 %v726
        %v931 = vpop.f32.mrf.mxu0
        %v932 = vadd.f32 %v656, %v931
        %v933 = vpop.f32.mrf.mxu0
        %934 = vmatprep.mubr.f32.mxu0 0.0
        %935 = vmatmul.mubr.f32.gmra.mxu0 %v729
        %v936 = vpop.f32.mrf.mxu0
        %v937 = vadd.f32 %v656, %v936
        %v938 = vpop.f32.mrf.mxu0
        %939 = vmatprep.mubr.f32.mxu0 0.0
        %940 = vmatmul.mubr.f32.gmra.mxu0 %v732
        %v941 = vpop.f32.mrf.mxu0
        %v942 = vadd.f32 %v656, %v941
        %v943 = vpop.f32.mrf.mxu0
        %944 = vmatprep.mubr.f32.mxu0 0.0
        %945 = vmatmul.mubr.f32.gmra.mxu0 %v735
        %v946 = vpop.f32.mrf.mxu0
        %v947 = vadd.f32 %v656, %v946
        %v948 = vpop.f32.mrf.mxu0
        %949 = vmatprep.mubr.f32.mxu0 0.0
        %950 = vmatmul.mubr.f32.gmra.mxu0 %v738
        %v951 = vpop.f32.mrf.mxu0
        %v952 = vadd.f32 %v656, %v951
        %v953 = vpop.f32.mrf.mxu0
        %954 = vmatprep.mubr.f32.mxu0 0.0
        %955 = vmatmul.mubr.f32.gmra.mxu0 %v741
        %v956 = vpop.f32.mrf.mxu0
        %v957 = vadd.f32 %v656, %v956
        %v958 = vpop.f32.mrf.mxu0
        %959 = vmatprep.mubr.f32.mxu0 0.0
        %960 = vmatmul.mubr.f32.gmra.mxu0 %v744
        %v961 = vpop.f32.mrf.mxu0
        %v962 = vadd.f32 %v656, %v961
        %v963 = vpop.f32.mrf.mxu0
        %964 = vmatprep.mubr.f32.mxu0 0.0
        %965 = vmatmul.mubr.f32.gmra.mxu0 %v747
        %v966 = vpop.f32.mrf.mxu0
        %v967 = vadd.f32 %v656, %v966
        %v968 = vpop.f32.mrf.mxu0
        %969 = vmatprep.mubr.f32.mxu0 0.0
        %970 = vmatmul.mubr.f32.gmra.mxu0 %v750
        %v971 = vpop.f32.mrf.mxu0
        %v972 = vadd.f32 %v656, %v971
        %v973 = vpop.f32.mrf.mxu0
        %974 = vmatprep.mubr.f32.mxu0 0.0
        %975 = vmatmul.mubr.f32.gmra.mxu0 %v753
        %v976 = vpop.f32.mrf.mxu0
        %v977 = vadd.f32 %v656, %v976
        %v978 = vpop.f32.mrf.mxu0
        %979 = vdwg.mxu0
        %vm980 = vcmask 130048
        %981 = vst.msk [vmem:[%s226] sm:$0xff] %vm980, %v822
        %982 = vst.msk [vmem:[%s226 + $0x8] sm:$0xff] %vm980, %v827
        %983 = vst.msk [vmem:[%s226 + $0x10] sm:$0xff] %vm980, %v832
        %984 = vst.msk [vmem:[%s226 + $0x18] sm:$0xff] %vm980, %v837
        %985 = vst.msk [vmem:[%s226 + $0x20] sm:$0xff] %vm980, %v842
        %986 = vst.msk [vmem:[%s226 + $0x28] sm:$0xff] %vm980, %v847
        %987 = vst.msk [vmem:[%s226 + $0x30] sm:$0xff] %vm980, %v852
        %988 = vst.msk [vmem:[%s226 + $0x38] sm:$0xff] %vm980, %v857
        %989 = vst.msk [vmem:[%s226 + $0x40] sm:$0xff] %vm980, %v862
        %990 = vst.msk [vmem:[%s226 + $0x48] sm:$0xff] %vm980, %v867
        %991 = vst.msk [vmem:[%s226 + $0x50] sm:$0xff] %vm980, %v872
        %992 = vst.msk [vmem:[%s226 + $0x58] sm:$0xff] %vm980, %v877
        %993 = vst.msk [vmem:[%s226 + $0x60] sm:$0xff] %vm980, %v882
        %994 = vst.msk [vmem:[%s226 + $0x68] sm:$0xff] %vm980, %v887
        %995 = vst.msk [vmem:[%s226 + $0x70] sm:$0xff] %vm980, %v892
        %996 = vst.msk [vmem:[%s226 + $0x78] sm:$0xff] %vm980, %v897
        %997 = vst.msk [vmem:[%s226 + $0x80] sm:$0xff] %vm980, %v902
        %998 = vst.msk [vmem:[%s226 + $0x88] sm:$0xff] %vm980, %v907
        %999 = vst.msk [vmem:[%s226 + $0x90] sm:$0xff] %vm980, %v912
        %1000 = vst.msk [vmem:[%s226 + $0x98] sm:$0xff] %vm980, %v917
        %1001 = vst.msk [vmem:[%s226 + $0xa0] sm:$0xff] %vm980, %v922
        %1002 = vst.msk [vmem:[%s226 + $0xa8] sm:$0xff] %vm980, %v927
        %1003 = vst.msk [vmem:[%s226 + $0xb0] sm:$0xff] %vm980, %v932
        %1004 = vst.msk [vmem:[%s226 + $0xb8] sm:$0xff] %vm980, %v937
        %1005 = vst.msk [vmem:[%s226 + $0xc0] sm:$0xff] %vm980, %v942
        %1006 = vst.msk [vmem:[%s226 + $0xc8] sm:$0xff] %vm980, %v947
        %1007 = vst.msk [vmem:[%s226 + $0xd0] sm:$0xff] %vm980, %v952
        %1008 = vst.msk [vmem:[%s226 + $0xd8] sm:$0xff] %vm980, %v957
        %1009 = vst.msk [vmem:[%s226 + $0xe0] sm:$0xff] %vm980, %v962
        %1010 = vst.msk [vmem:[%s226 + $0xe8] sm:$0xff] %vm980, %v967
        %1011 = vst.msk [vmem:[%s226 + $0xf0] sm:$0xff] %vm980, %v972
        %1012 = vst.msk [vmem:[%s226 + $0xf8] sm:$0xff] %vm980, %v977
        %s1013 = sand.u32 %s134, 1
        %s1014 = sand.u32 %s134, 1
        %s1015 = smul.addr %s1014, 256
        %s1016 = scalar_lea.vmem [#allocation2], %s1015
        // Predicated region
        $region41: #{tpu_custom_call.1} parent=39 // pred_check
          %p1017 = pneg %p144
        $region42: #{tpu_custom_call.1} parent=39 // pred_check_branch
          %1019 = sbr.rel (%p1017) target = $region44
        $region43: #{tpu_custom_call.1} parent=39 // pred_region
          %s1020 = smul.u32 32, %s16
          %s1021 = ssub.s32 63, %s1020
          %p1022 = scmp.lt.s32.totalorder %s1021, 32
          %s1023 = scalar_select %p1022, %s1021, 32
          %s1024 = smul.u32 128, %s1023
          %p1025 = scmp.ne.s32.totalorder 0, %s1024
          %s1026 = smul.addr %s1020, 8
          %s1027 = scalar_lea.vmem %s5, %s1026
          // Predicated region
          $region45: #{tpu_custom_call.1} parent=43 // pred_check
            %p1028 = pneg %p1025
          $region46: #{tpu_custom_call.1} parent=43 // pred_check_branch
            %1030 = sbr.rel (%p1028) target = $region48
          $region47: #{tpu_custom_call.1} parent=43 // pred_region
            // Predicated region
            $region49: #{tpu_custom_call.1} parent=47 // pred_check
              _
            $region50: #{tpu_custom_call.1} parent=47 // pred_check_branch
              %1032 = sbr.rel (0) target = $region52
            $region51: #{tpu_custom_call.1} parent=47 // pred_region
              // Predicated region
              $region71: #{tpu_custom_call.1} parent=51 // pred_check
                _
              $region72: #{tpu_custom_call.1} parent=51 // pred_check_branch
                %1144 = sbr.rel (0) target = $region74
              $region73: #{tpu_custom_call.1} parent=51 // pred_region
                %s1145 = sshrl.u32 %s1023, 5
                // While loop
                $region75: #{tpu_custom_call.1} parent=73 // loop_pre_header
                  _
                $region76: #{tpu_custom_call.1} parent=73 // loop_header
                  %s1147 = sphi 0, %s1149
                  %p1148 = scmp.ge.s32.totalorder %s1147, %s1145
                  %s1152 = sphi 0, %s1221
                  %s1153 = sphi %s1016, %s1224
                  %s1154 = sphi %s1027, %s1225
                $region77: #{tpu_custom_call.1} parent=73 // loop_header_branch
                  %1151 = sbr.rel (%p1148) target = $region81
                $region78: #{tpu_custom_call.1} parent=73 // loop_body
                  %v1155 = vld [vmem:[%s1153] sm:$0xff]
                  %1156 = vst [vmem:[%s1154] sm:$0xff] %v1155
                  %v1157 = vld [vmem:[%s1153 + $0x8] sm:$0xff]
                  %1158 = vst [vmem:[%s1154 + $0x8] sm:$0xff] %v1157
                  %v1159 = vld [vmem:[%s1153 + $0x10] sm:$0xff]
                  %1160 = vst [vmem:[%s1154 + $0x10] sm:$0xff] %v1159
                  %v1161 = vld [vmem:[%s1153 + $0x18] sm:$0xff]
                  %1162 = vst [vmem:[%s1154 + $0x18] sm:$0xff] %v1161
                  %v1163 = vld [vmem:[%s1153 + $0x20] sm:$0xff]
                  %1164 = vst [vmem:[%s1154 + $0x20] sm:$0xff] %v1163
                  %v1165 = vld [vmem:[%s1153 + $0x28] sm:$0xff]
                  %1166 = vst [vmem:[%s1154 + $0x28] sm:$0xff] %v1165
                  %v1167 = vld [vmem:[%s1153 + $0x30] sm:$0xff]
                  %1168 = vst [vmem:[%s1154 + $0x30] sm:$0xff] %v1167
                  %v1169 = vld [vmem:[%s1153 + $0x38] sm:$0xff]
                  %1170 = vst [vmem:[%s1154 + $0x38] sm:$0xff] %v1169
                  %v1171 = vld [vmem:[%s1153 + $0x40] sm:$0xff]
                  %1172 = vst [vmem:[%s1154 + $0x40] sm:$0xff] %v1171
                  %v1173 = vld [vmem:[%s1153 + $0x48] sm:$0xff]
                  %1174 = vst [vmem:[%s1154 + $0x48] sm:$0xff] %v1173
                  %v1175 = vld [vmem:[%s1153 + $0x50] sm:$0xff]
                  %1176 = vst [vmem:[%s1154 + $0x50] sm:$0xff] %v1175
                  %v1177 = vld [vmem:[%s1153 + $0x58] sm:$0xff]
                  %1178 = vst [vmem:[%s1154 + $0x58] sm:$0xff] %v1177
                  %v1179 = vld [vmem:[%s1153 + $0x60] sm:$0xff]
                  %1180 = vst [vmem:[%s1154 + $0x60] sm:$0xff] %v1179
                  %v1181 = vld [vmem:[%s1153 + $0x68] sm:$0xff]
                  %1182 = vst [vmem:[%s1154 + $0x68] sm:$0xff] %v1181
                  %v1183 = vld [vmem:[%s1153 + $0x70] sm:$0xff]
                  %1184 = vst [vmem:[%s1154 + $0x70] sm:$0xff] %v1183
                  %v1185 = vld [vmem:[%s1153 + $0x78] sm:$0xff]
                  %1186 = vst [vmem:[%s1154 + $0x78] sm:$0xff] %v1185
                  %v1187 = vld [vmem:[%s1153 + $0x80] sm:$0xff]
                  %1188 = vst [vmem:[%s1154 + $0x80] sm:$0xff] %v1187
                  %v1189 = vld [vmem:[%s1153 + $0x88] sm:$0xff]
                  %1190 = vst [vmem:[%s1154 + $0x88] sm:$0xff] %v1189
                  %v1191 = vld [vmem:[%s1153 + $0x90] sm:$0xff]
                  %1192 = vst [vmem:[%s1154 + $0x90] sm:$0xff] %v1191
                  %v1193 = vld [vmem:[%s1153 + $0x98] sm:$0xff]
                  %1194 = vst [vmem:[%s1154 + $0x98] sm:$0xff] %v1193
                  %v1195 = vld [vmem:[%s1153 + $0xa0] sm:$0xff]
                  %1196 = vst [vmem:[%s1154 + $0xa0] sm:$0xff] %v1195
                  %v1197 = vld [vmem:[%s1153 + $0xa8] sm:$0xff]
                  %1198 = vst [vmem:[%s1154 + $0xa8] sm:$0xff] %v1197
                  %v1199 = vld [vmem:[%s1153 + $0xb0] sm:$0xff]
                  %1200 = vst [vmem:[%s1154 + $0xb0] sm:$0xff] %v1199
                  %v1201 = vld [vmem:[%s1153 + $0xb8] sm:$0xff]
                  %1202 = vst [vmem:[%s1154 + $0xb8] sm:$0xff] %v1201
                  %v1203 = vld [vmem:[%s1153 + $0xc0] sm:$0xff]
                  %1204 = vst [vmem:[%s1154 + $0xc0] sm:$0xff] %v1203
                  %v1205 = vld [vmem:[%s1153 + $0xc8] sm:$0xff]
                  %1206 = vst [vmem:[%s1154 + $0xc8] sm:$0xff] %v1205
                  %v1207 = vld [vmem:[%s1153 + $0xd0] sm:$0xff]
                  %1208 = vst [vmem:[%s1154 + $0xd0] sm:$0xff] %v1207
                  %v1209 = vld [vmem:[%s1153 + $0xd8] sm:$0xff]
                  %1210 = vst [vmem:[%s1154 + $0xd8] sm:$0xff] %v1209
                  %v1211 = vld [vmem:[%s1153 + $0xe0] sm:$0xff]
                  %1212 = vst [vmem:[%s1154 + $0xe0] sm:$0xff] %v1211
                  %v1213 = vld [vmem:[%s1153 + $0xe8] sm:$0xff]
                  %1214 = vst [vmem:[%s1154 + $0xe8] sm:$0xff] %v1213
                  %v1215 = vld [vmem:[%s1153 + $0xf0] sm:$0xff]
                  %1216 = vst [vmem:[%s1154 + $0xf0] sm:$0xff] %v1215
                  %v1217 = vld [vmem:[%s1153 + $0xf8] sm:$0xff]
                  %1218 = vst [vmem:[%s1154 + $0xf8] sm:$0xff] %v1217
                  %s1219 = sadd.s32 1, %s1152
                  %p1220 = scmp.ge.s32.totalorder %s1219, %s1145
                  %s1221 = scalar_select %p1220, 0, %s1219
                  %s1222 = smul.u32 %s1221, 256
                  %s1223 = smul.u32 %s1221, 256
                  %s1224 = scalar_lea.vmem %s1016, %s1222 [#allocation2]
                  %s1225 = scalar_lea.vmem %s1027, %s1223
                $region79: #{tpu_custom_call.1} parent=73 // loop_footer
                  %s1149 = sadd.s32 %s1147, 1
                $region80: #{tpu_custom_call.1} parent=73 // loop_footer_branch
                  %1146 = sbr.rel target = $region76
                $region81: #{tpu_custom_call.1} parent=73 // loop_exit
                  _
                %s1226 = sshrl.u32 %s1023, 5
                %s1227 = sand.u32 %s1023, 31
                %s1228 = smul.u32 %s1226, 32
                %s1229 = smul.u32 8, %s1228
                %s1230 = scalar_lea.vmem %s1016, %s1229 [#allocation2]
                %s1231 = smul.u32 8, %s1228
                %s1232 = scalar_lea.vmem %s1027, %s1231
                // While loop
                $region82: #{tpu_custom_call.1} parent=73 // loop_pre_header
                  _
                $region83: #{tpu_custom_call.1} parent=73 // loop_header
                  %s1234 = sphi 0, %s1236
                  %p1235 = scmp.ge.s32.totalorder %s1234, %s1227
                  %s1239 = sphi 0, %s1246
                  %s1240 = sphi %s1230, %s1249
                  %s1241 = sphi %s1232, %s1250
                $region84: #{tpu_custom_call.1} parent=73 // loop_header_branch
                  %1238 = sbr.rel (%p1235) target = $region88
                $region85: #{tpu_custom_call.1} parent=73 // loop_body
                  %v1242 = vld [vmem:[%s1240] sm:$0xff]
                  %1243 = vst [vmem:[%s1241] sm:$0xff] %v1242
                  %s1244 = sadd.s32 1, %s1239
                  %p1245 = scmp.ge.s32.totalorder %s1244, %s1227
                  %s1246 = scalar_select %p1245, 0, %s1244
                  %s1247 = smul.u32 %s1246, 8
                  %s1248 = smul.u32 %s1246, 8
                  %s1249 = scalar_lea.vmem %s1230, %s1247 [#allocation2]
                  %s1250 = scalar_lea.vmem %s1232, %s1248
                $region86: #{tpu_custom_call.1} parent=73 // loop_footer
                  %s1236 = sadd.s32 %s1234, 1
                $region87: #{tpu_custom_call.1} parent=73 // loop_footer_branch
                  %1233 = sbr.rel target = $region83
                $region88: #{tpu_custom_call.1} parent=73 // loop_exit
                  _
              $region74: #{tpu_custom_call.1} parent=51 // pred_fallthru
                _
              // Predicated region
              $region89: #{tpu_custom_call.1} parent=51 // pred_check
                _
              $region90: #{tpu_custom_call.1} parent=51 // pred_check_branch
                %1252 = sbr.rel target = $region92
              $region91: #{tpu_custom_call.1} parent=51 // pred_region
                _
              $region92: #{tpu_custom_call.1} parent=51 // pred_fallthru
                _
            $region52: #{tpu_custom_call.1} parent=47 // pred_fallthru
              _
            // Predicated region
            $region53: #{tpu_custom_call.1} parent=47 // pred_check
              _
            $region54: #{tpu_custom_call.1} parent=47 // pred_check_branch
              %1034 = sbr.rel target = $region56
            $region55: #{tpu_custom_call.1} parent=47 // pred_region
              %s1036 = ssub.s32 256, 1
              %s1037 = sshrl.u32 %s1023, 5
              // While loop
              $region57: #{tpu_custom_call.1} parent=55 // loop_pre_header
                _
              $region58: #{tpu_custom_call.1} parent=55 // loop_header
                %s1039 = sphi 0, %s1041
                %p1040 = scmp.ge.s32.totalorder %s1039, %s1037
                %s1044 = sphi 0, %s1113
                %s1045 = sphi %s1016, %s1116
                %s1046 = sphi %s1027, %s1117
              $region59: #{tpu_custom_call.1} parent=55 // loop_header_branch
                %1043 = sbr.rel (%p1040) target = $region63
              $region60: #{tpu_custom_call.1} parent=55 // loop_body
                %v1047 = vld [vmem:[%s1045] sm:%s1036]
                %1048 = vst [vmem:[%s1046] sm:%s1036] %v1047
                %v1049 = vld [vmem:[%s1045 + $0x8] sm:%s1036]
                %1050 = vst [vmem:[%s1046 + $0x8] sm:%s1036] %v1049
                %v1051 = vld [vmem:[%s1045 + $0x10] sm:%s1036]
                %1052 = vst [vmem:[%s1046 + $0x10] sm:%s1036] %v1051
                %v1053 = vld [vmem:[%s1045 + $0x18] sm:%s1036]
                %1054 = vst [vmem:[%s1046 + $0x18] sm:%s1036] %v1053
                %v1055 = vld [vmem:[%s1045 + $0x20] sm:%s1036]
                %1056 = vst [vmem:[%s1046 + $0x20] sm:%s1036] %v1055
                %v1057 = vld [vmem:[%s1045 + $0x28] sm:%s1036]
                %1058 = vst [vmem:[%s1046 + $0x28] sm:%s1036] %v1057
                %v1059 = vld [vmem:[%s1045 + $0x30] sm:%s1036]
                %1060 = vst [vmem:[%s1046 + $0x30] sm:%s1036] %v1059
                %v1061 = vld [vmem:[%s1045 + $0x38] sm:%s1036]
                %1062 = vst [vmem:[%s1046 + $0x38] sm:%s1036] %v1061
                %v1063 = vld [vmem:[%s1045 + $0x40] sm:%s1036]
                %1064 = vst [vmem:[%s1046 + $0x40] sm:%s1036] %v1063
                %v1065 = vld [vmem:[%s1045 + $0x48] sm:%s1036]
                %1066 = vst [vmem:[%s1046 + $0x48] sm:%s1036] %v1065
                %v1067 = vld [vmem:[%s1045 + $0x50] sm:%s1036]
                %1068 = vst [vmem:[%s1046 + $0x50] sm:%s1036] %v1067
                %v1069 = vld [vmem:[%s1045 + $0x58] sm:%s1036]
                %1070 = vst [vmem:[%s1046 + $0x58] sm:%s1036] %v1069
                %v1071 = vld [vmem:[%s1045 + $0x60] sm:%s1036]
                %1072 = vst [vmem:[%s1046 + $0x60] sm:%s1036] %v1071
                %v1073 = vld [vmem:[%s1045 + $0x68] sm:%s1036]
                %1074 = vst [vmem:[%s1046 + $0x68] sm:%s1036] %v1073
                %v1075 = vld [vmem:[%s1045 + $0x70] sm:%s1036]
                %1076 = vst [vmem:[%s1046 + $0x70] sm:%s1036] %v1075
                %v1077 = vld [vmem:[%s1045 + $0x78] sm:%s1036]
                %1078 = vst [vmem:[%s1046 + $0x78] sm:%s1036] %v1077
                %v1079 = vld [vmem:[%s1045 + $0x80] sm:%s1036]
                %1080 = vst [vmem:[%s1046 + $0x80] sm:%s1036] %v1079
                %v1081 = vld [vmem:[%s1045 + $0x88] sm:%s1036]
                %1082 = vst [vmem:[%s1046 + $0x88] sm:%s1036] %v1081
                %v1083 = vld [vmem:[%s1045 + $0x90] sm:%s1036]
                %1084 = vst [vmem:[%s1046 + $0x90] sm:%s1036] %v1083
                %v1085 = vld [vmem:[%s1045 + $0x98] sm:%s1036]
                %1086 = vst [vmem:[%s1046 + $0x98] sm:%s1036] %v1085
                %v1087 = vld [vmem:[%s1045 + $0xa0] sm:%s1036]
                %1088 = vst [vmem:[%s1046 + $0xa0] sm:%s1036] %v1087
                %v1089 = vld [vmem:[%s1045 + $0xa8] sm:%s1036]
                %1090 = vst [vmem:[%s1046 + $0xa8] sm:%s1036] %v1089
                %v1091 = vld [vmem:[%s1045 + $0xb0] sm:%s1036]
                %1092 = vst [vmem:[%s1046 + $0xb0] sm:%s1036] %v1091
                %v1093 = vld [vmem:[%s1045 + $0xb8] sm:%s1036]
                %1094 = vst [vmem:[%s1046 + $0xb8] sm:%s1036] %v1093
                %v1095 = vld [vmem:[%s1045 + $0xc0] sm:%s1036]
                %1096 = vst [vmem:[%s1046 + $0xc0] sm:%s1036] %v1095
                %v1097 = vld [vmem:[%s1045 + $0xc8] sm:%s1036]
                %1098 = vst [vmem:[%s1046 + $0xc8] sm:%s1036] %v1097
                %v1099 = vld [vmem:[%s1045 + $0xd0] sm:%s1036]
                %1100 = vst [vmem:[%s1046 + $0xd0] sm:%s1036] %v1099
                %v1101 = vld [vmem:[%s1045 + $0xd8] sm:%s1036]
                %1102 = vst [vmem:[%s1046 + $0xd8] sm:%s1036] %v1101
                %v1103 = vld [vmem:[%s1045 + $0xe0] sm:%s1036]
                %1104 = vst [vmem:[%s1046 + $0xe0] sm:%s1036] %v1103
                %v1105 = vld [vmem:[%s1045 + $0xe8] sm:%s1036]
                %1106 = vst [vmem:[%s1046 + $0xe8] sm:%s1036] %v1105
                %v1107 = vld [vmem:[%s1045 + $0xf0] sm:%s1036]
                %1108 = vst [vmem:[%s1046 + $0xf0] sm:%s1036] %v1107
                %v1109 = vld [vmem:[%s1045 + $0xf8] sm:%s1036]
                %1110 = vst [vmem:[%s1046 + $0xf8] sm:%s1036] %v1109
                %s1111 = sadd.s32 1, %s1044
                %p1112 = scmp.ge.s32.totalorder %s1111, %s1037
                %s1113 = scalar_select %p1112, 0, %s1111
                %s1114 = smul.u32 %s1113, 256
                %s1115 = smul.u32 %s1113, 256
                %s1116 = scalar_lea.vmem %s1016, %s1114 [#allocation2]
                %s1117 = scalar_lea.vmem %s1027, %s1115
              $region61: #{tpu_custom_call.1} parent=55 // loop_footer
                %s1041 = sadd.s32 %s1039, 1
              $region62: #{tpu_custom_call.1} parent=55 // loop_footer_branch
                %1038 = sbr.rel target = $region58
              $region63: #{tpu_custom_call.1} parent=55 // loop_exit
                _
              %s1118 = sshrl.u32 %s1023, 5
              %s1119 = sand.u32 %s1023, 31
              %s1120 = smul.u32 %s1118, 32
              %s1121 = smul.u32 8, %s1120
              %s1122 = scalar_lea.vmem %s1016, %s1121 [#allocation2]
              %s1123 = smul.u32 8, %s1120
              %s1124 = scalar_lea.vmem %s1027, %s1123
              // While loop
              $region64: #{tpu_custom_call.1} parent=55 // loop_pre_header
                _
              $region65: #{tpu_custom_call.1} parent=55 // loop_header
                %s1126 = sphi 0, %s1128
                %p1127 = scmp.ge.s32.totalorder %s1126, %s1119
                %s1131 = sphi 0, %s1138
                %s1132 = sphi %s1122, %s1141
                %s1133 = sphi %s1124, %s1142
              $region66: #{tpu_custom_call.1} parent=55 // loop_header_branch
                %1130 = sbr.rel (%p1127) target = $region70
              $region67: #{tpu_custom_call.1} parent=55 // loop_body
                %v1134 = vld [vmem:[%s1132] sm:%s1036]
                %1135 = vst [vmem:[%s1133] sm:%s1036] %v1134
                %s1136 = sadd.s32 1, %s1131
                %p1137 = scmp.ge.s32.totalorder %s1136, %s1119
                %s1138 = scalar_select %p1137, 0, %s1136
                %s1139 = smul.u32 %s1138, 8
                %s1140 = smul.u32 %s1138, 8
                %s1141 = scalar_lea.vmem %s1122, %s1139 [#allocation2]
                %s1142 = scalar_lea.vmem %s1124, %s1140
              $region68: #{tpu_custom_call.1} parent=55 // loop_footer
                %s1128 = sadd.s32 %s1126, 1
              $region69: #{tpu_custom_call.1} parent=55 // loop_footer_branch
                %1125 = sbr.rel target = $region65
              $region70: #{tpu_custom_call.1} parent=55 // loop_exit
                _
            $region56: #{tpu_custom_call.1} parent=47 // pred_fallthru
              _
          $region48: #{tpu_custom_call.1} parent=43 // pred_fallthru
            _
          %1253 = vnop
        $region44: #{tpu_custom_call.1} parent=39 // pred_fallthru
          _
      $region40: #{tpu_custom_call.1} parent=5 // pred_fallthru
        _
      %p1254 = scmp.le.s32.totalorder 2, %s11
      // Predicated region
      $region93: #{tpu_custom_call.1} parent=5 // pred_check
        %p1255 = pneg %p1254
      $region94: #{tpu_custom_call.1} parent=5 // pred_check_branch
        %1257 = sbr.rel (%p1255) target = $region96
      $region95: #{tpu_custom_call.1} parent=5 // pred_region
        %s1258 = ssub.s32 %s11, 2
        // Predicated region
        $region97: #{tpu_custom_call.1} parent=95 // pred_check
          %p1259 = pneg %p150
        $region98: #{tpu_custom_call.1} parent=95 // pred_check_branch
          %1261 = sbr.rel (%p1259) target = $region100
        $region99: #{tpu_custom_call.1} parent=95 // pred_region
          %s1262 = sand.u32 %s135, 1
          %s1263 = sand.u32 %s135, 1
          %s1264 = smul.addr %s1263, 256
          %s1265 = scalar_lea.vmem [#allocation2], %s1264
        $region100: #{tpu_custom_call.1} parent=95 // pred_fallthru
          _
      $region96: #{tpu_custom_call.1} parent=5 // pred_fallthru
        _
    $region6: #{tpu_custom_call.1} parent=1 // loop_footer
      %s15 = sadd.s32 1, %s11
    $region7: #{tpu_custom_call.1} parent=1 // loop_footer_branch
      %10 = sbr.rel target = $region3
    $region8: #{tpu_custom_call.1} parent=1 // loop_exit
      _

</llo_original>
